<compile_context>
chip_gen: v5e
topology: v5e:2x2
jax: 0.10.0
libtpu: 0.0.40
codegen_flags: <defaults>
</compile_context>

<pallas_src>
import functools

import jax
import jax.numpy as jnp
from jax.experimental import pallas as pl
from jax.experimental.pallas import tpu as pltpu

_LANE = 128          # TPU lane width; pad the action dim to this.
_SUBLANE = 8         # f32 sublane granularity.
_MAX_TILE = 256      # default batch-tile (fills the 256-row MXU on v6e/v7x).


def _round_up(x, m):
    return (x + m - 1) // m * m


def _qnet_kernel(x_ref, w1_ref, b1_ref, w2_ref, b2_ref, w3_ref, b3_ref, o_ref):
    """One (TB, S) batch tile: fc1 -> relu -> fc2 -> relu -> fc3 (padded out)."""
    cdt = w1_ref.dtype  # bf16 compute dtype for MXU inputs
    x = x_ref[...].astype(cdt)
    # Layer 1: bf16 x bf16 -> f32 accumulate, bias/ReLU in f32.
    h1 = jnp.dot(x, w1_ref[...], preferred_element_type=jnp.float32) + b1_ref[...]
    h1 = jnp.maximum(h1, 0.0)
    # Layer 2.
    h2 = jnp.dot(h1.astype(cdt), w2_ref[...],
                 preferred_element_type=jnp.float32) + b2_ref[...]
    h2 = jnp.maximum(h2, 0.0)
    # Layer 3 (output columns padded to a lane-dense 128-wide block).
    o_ref[...] = (jnp.dot(h2.astype(cdt), w3_ref[...],
                          preferred_element_type=jnp.float32)
                  + b3_ref[...]).astype(o_ref.dtype)


def qnetwork_forward(state, params, *, max_tile=_MAX_TILE):
    """Forward pass of the 3-layer MLP as one Pallas TPU kernel.

    state:  (B, state_size) float32
    params: dict with w1 (S,H1) bf16, b1 (1,H1) f32, w2 (H1,H2) bf16,
            b2 (1,H2) f32, w3 (H2,A) bf16, b3 (1,A) f32
    returns (B, A) float32 Q-values.

    NOTE: for tiny per-step action selection (B <= 8) the plain-XLA
    `qnetwork_ref` is cheaper than the custom-call dispatch; this Pallas path
    is intended for the batched training / inference workload.
    """
    w1, b1 = params["w1"], params["b1"]
    w2, b2 = params["w2"], params["b2"]
    w3, b3 = params["w3"], params["b3"]

    B, S = state.shape
    H1 = w1.shape[1]
    H2 = w2.shape[1]
    A = w3.shape[1]

    # Lane-dense output: pad action columns to 128 (zeros don't change Q-values).
    A_pad = _round_up(A, _LANE)
    if A_pad != A:
        w3 = jnp.pad(w3, ((0, 0), (0, A_pad - A)))
        b3 = jnp.pad(b3, ((0, 0), (0, A_pad - A)))

    # Batch tile: multiple of 8 sublanes, capped at max_tile; pad ragged tail.
    tb = min(max_tile, _round_up(B, _SUBLANE))
    B_pad = _round_up(B, tb)
    if B_pad != B:
        state = jnp.pad(state, ((0, B_pad - B), (0, 0)))
    num_tiles = B_pad // tb

    # Weights/biases: constant index_map -> loaded once, VMEM-resident across grid.
    def resident(arr):
        return pl.BlockSpec(arr.shape, lambda i: (0,) * arr.ndim)

    cost = pl.CostEstimate(
        flops=2 * B_pad * (S * H1 + H1 * H2 + H2 * A_pad),
        transcendentals=0,
        bytes_accessed=(state.size * state.dtype.itemsize
                        + w1.size * w1.dtype.itemsize + w2.size * w2.dtype.itemsize
                        + w3.size * w3.dtype.itemsize
                        + b1.size * 4 + b2.size * 4 + b3.size * 4
                        + B_pad * A_pad * 4),
    )

    out = pl.pallas_call(
        _qnet_kernel,
        out_shape=jax.ShapeDtypeStruct((B_pad, A_pad), jnp.float32),
        grid=(num_tiles,),
        in_specs=[
            pl.BlockSpec((tb, S), lambda i: (i, 0)),   # state tile
            resident(w1), resident(b1),
            resident(w2), resident(b2),
            resident(w3), resident(b3),
        ],
        out_specs=pl.BlockSpec((tb, A_pad), lambda i: (i, 0)),
        compiler_params=pltpu.CompilerParams(
            dimension_semantics=("parallel",),          # megacore split on v7x
        ),
        cost_estimate=cost,
    )(state, w1, b1, w2, b2, w3, b3)

    return out[:B, :A]


def init_params(key, state_size, action_size, fc1_units=64, fc2_units=64,
                weight_dtype=jnp.bfloat16):
    """Init mimicking nn.Linear default (U[-1/sqrt(fan_in), 1/sqrt(fan_in)]).

    Weights are stored (in, out) and cast to `weight_dtype` (bf16 for the MXU
    native path); biases stay f32.
    """
    def linear_init(k, fan_in, fan_out):
        kw, kb = jax.random.split(k)
        bound = 1.0 / jnp.sqrt(jnp.float32(fan_in))
        w = jax.random.uniform(kw, (fan_in, fan_out), jnp.float32, -bound, bound)
        b = jax.random.uniform(kb, (1, fan_out), jnp.float32, -bound, bound)
        return w.astype(weight_dtype), b

    k1, k2, k3 = jax.random.split(key, 3)
    w1, b1 = linear_init(k1, state_size, fc1_units)
    w2, b2 = linear_init(k2, fc1_units, fc2_units)
    w3, b3 = linear_init(k3, fc2_units, action_size)
    return {"w1": w1, "b1": b1, "w2": w2, "b2": b2, "w3": w3, "b3": b3}


def qnetwork_ref(state, params):
    """Pure-JAX reference (same bf16-matmul / f32-accumulate semantics)."""
    cdt = params["w1"].dtype
    h1 = jnp.maximum(
        jnp.dot(state.astype(cdt), params["w1"],
                preferred_element_type=jnp.float32) + params["b1"], 0.0)
    h2 = jnp.maximum(
        jnp.dot(h1.astype(cdt), params["w2"],
                preferred_element_type=jnp.float32) + params["b2"], 0.0)
    return jnp.dot(h2.astype(cdt), params["w3"],
                   preferred_element_type=jnp.float32) + params["b3"]


if __name__ == "__main__":
    key = jax.random.PRNGKey(0)
    k_params, k_small, k_large = jax.random.split(key, 3)

    state_size = 8
    action_size = 4
    params = init_params(k_params, state_size, action_size,
                         fc1_units=64, fc2_units=64)

    # Small batch (matches the original spec-sized example; single ragged tile).
    state_small = jax.random.normal(k_small, (2, state_size), jnp.float32)
    q_small = jax.block_until_ready(qnetwork_forward(state_small, params))
    assert q_small.shape == (2, action_size)
    assert jnp.allclose(q_small, qnetwork_ref(state_small, params),
                        atol=1e-3, rtol=1e-3)

    # Larger batch exercising the pipelined multi-tile grid path.
    state_large = jax.random.normal(k_large, (512, state_size), jnp.float32)
    q_large = jax.block_until_ready(qnetwork_forward(state_large, params))
    assert q_large.shape == (512, action_size)
    assert jnp.allclose(q_large, qnetwork_ref(state_large, params),
                        atol=1e-3, rtol=1e-3)

    print("KERNEL_OK")
</pallas_src>

<mosaic_0001>
module attributes {stable_mosaic.version = 11 : i64} {
  func.func @_qnet_kernel(%arg0: i32, %arg1: memref<8x8xf32, #tpu.memory_space<vmem>>, %arg2: memref<8x64xbf16, #tpu.memory_space<vmem>>, %arg3: memref<1x64xf32, #tpu.memory_space<vmem>>, %arg4: memref<64x64xbf16, #tpu.memory_space<vmem>>, %arg5: memref<1x64xf32, #tpu.memory_space<vmem>>, %arg6: memref<64x128xbf16, #tpu.memory_space<vmem>>, %arg7: memref<1x128xf32, #tpu.memory_space<vmem>>, %arg8: memref<8x128xf32, #tpu.memory_space<vmem>>) attributes {dimension_semantics = [#tpu.dimension_semantics<parallel>], iteration_bounds = array<i64: 1>, scalar_prefetch = 0 : i64, scratch_operands = 0 : i64, tpu.core_type = #tpu.core_type<tc>, window_params = [{transform_indices = @transform_0, window_bounds = array<i64: 8, 8>}, {pipeline_mode = #tpu.pipeline_mode<synchronous>, transform_indices = @transform_1, window_bounds = array<i64: 8, 64>}, {pipeline_mode = #tpu.pipeline_mode<synchronous>, transform_indices = @transform_2, window_bounds = array<i64: 1, 64>}, {pipeline_mode = #tpu.pipeline_mode<synchronous>, transform_indices = @transform_3, window_bounds = array<i64: 64, 64>}, {pipeline_mode = #tpu.pipeline_mode<synchronous>, transform_indices = @transform_4, window_bounds = array<i64: 1, 64>}, {pipeline_mode = #tpu.pipeline_mode<synchronous>, transform_indices = @transform_5, window_bounds = array<i64: 64, 128>}, {pipeline_mode = #tpu.pipeline_mode<synchronous>, transform_indices = @transform_6, window_bounds = array<i64: 1, 128>}, {transform_indices = @transform_7, window_bounds = array<i64: 8, 128>}]} {
    %c0 = arith.constant 0 : index
    %c0_0 = arith.constant 0 : index
    %0 = vector.load %arg1[%c0, %c0_0] : memref<8x8xf32, #tpu.memory_space<vmem>>, vector<8x8xf32>
    %1 = arith.truncf %0 : vector<8x8xf32> to vector<8x8xbf16>
    %c0_1 = arith.constant 0 : index
    %c0_2 = arith.constant 0 : index
    %2 = vector.load %arg2[%c0_1, %c0_2] : memref<8x64xbf16, #tpu.memory_space<vmem>>, vector<8x64xbf16>
    %cst = arith.constant dense<0.000000e+00> : vector<8x64xf32>
    %3 = tpu.matmul %1, %2, %cst {dimension_numbers = #tpu.dot_dimension_numbers<[1], [0], [0], [1], [0, 0, 1, 1], [], []>} : vector<8x8xbf16>, vector<8x64xbf16>, vector<8x64xf32> -> vector<8x64xf32>
    %c0_3 = arith.constant 0 : index
    %c0_4 = arith.constant 0 : index
    %4 = vector.load %arg3[%c0_3, %c0_4] : memref<1x64xf32, #tpu.memory_space<vmem>>, vector<1x64xf32>
    %5 = vector.broadcast %4 : vector<1x64xf32> to vector<8x64xf32>
    %6 = arith.addf %3, %5 : vector<8x64xf32>
    %cst_5 = arith.constant 0.000000e+00 : f32
    %7 = vector.broadcast %cst_5 : f32 to vector<8x64xf32>
    %8 = arith.maximumf %6, %7 : vector<8x64xf32>
    %9 = arith.truncf %8 : vector<8x64xf32> to vector<8x64xbf16>
    %c0_6 = arith.constant 0 : index
    %c0_7 = arith.constant 0 : index
    %10 = vector.load %arg4[%c0_6, %c0_7] : memref<64x64xbf16, #tpu.memory_space<vmem>>, vector<64x64xbf16>
    %cst_8 = arith.constant dense<0.000000e+00> : vector<8x64xf32>
    %11 = tpu.matmul %9, %10, %cst_8 {dimension_numbers = #tpu.dot_dimension_numbers<[1], [0], [0], [1], [0, 0, 1, 1], [], []>} : vector<8x64xbf16>, vector<64x64xbf16>, vector<8x64xf32> -> vector<8x64xf32>
    %c0_9 = arith.constant 0 : index
    %c0_10 = arith.constant 0 : index
    %12 = vector.load %arg5[%c0_9, %c0_10] : memref<1x64xf32, #tpu.memory_space<vmem>>, vector<1x64xf32>
    %13 = vector.broadcast %12 : vector<1x64xf32> to vector<8x64xf32>
    %14 = arith.addf %11, %13 : vector<8x64xf32>
    %cst_11 = arith.constant 0.000000e+00 : f32
    %15 = vector.broadcast %cst_11 : f32 to vector<8x64xf32>
    %16 = arith.maximumf %14, %15 : vector<8x64xf32>
    %17 = arith.truncf %16 : vector<8x64xf32> to vector<8x64xbf16>
    %c0_12 = arith.constant 0 : index
    %c0_13 = arith.constant 0 : index
    %18 = vector.load %arg6[%c0_12, %c0_13] : memref<64x128xbf16, #tpu.memory_space<vmem>>, vector<64x128xbf16>
    %cst_14 = arith.constant dense<0.000000e+00> : vector<8x128xf32>
    %19 = tpu.matmul %17, %18, %cst_14 {dimension_numbers = #tpu.dot_dimension_numbers<[1], [0], [0], [1], [0, 0, 1, 1], [], []>} : vector<8x64xbf16>, vector<64x128xbf16>, vector<8x128xf32> -> vector<8x128xf32>
    %c0_15 = arith.constant 0 : index
    %c0_16 = arith.constant 0 : index
    %20 = vector.load %arg7[%c0_15, %c0_16] : memref<1x128xf32, #tpu.memory_space<vmem>>, vector<1x128xf32>
    %21 = vector.broadcast %20 : vector<1x128xf32> to vector<8x128xf32>
    %22 = arith.addf %19, %21 : vector<8x128xf32>
    %c0_17 = arith.constant 0 : index
    %c0_18 = arith.constant 0 : index
    %23 = vector.load %arg8[%c0_17, %c0_18] : memref<8x128xf32, #tpu.memory_space<vmem>>, vector<8x128xf32>
    tpu.vector_store %arg8[%c0_17, %c0_18], %22 {strides = array<i32>} : memref<8x128xf32, #tpu.memory_space<vmem>>, vector<8x128xf32>,
    return
  }
  func.func @transform_0(%arg0: i32) -> (i32, i32) {
    %c0_i32 = arith.constant 0 : i32
    %c0_i32_0 = arith.constant 0 : i32
    return %arg0, %c0_i32 : i32, i32
  }
  func.func @transform_1(%arg0: i32) -> (i32, i32) {
    %c0_i32 = arith.constant 0 : i32
    %c0_i32_0 = arith.constant 0 : i32
    %c0_i32_1 = arith.constant 0 : i32
    return %c0_i32, %c0_i32_0 : i32, i32
  }
  func.func @transform_2(%arg0: i32) -> (i32, i32) {
    %c0_i32 = arith.constant 0 : i32
    %c0_i32_0 = arith.constant 0 : i32
    %c0_i32_1 = arith.constant 0 : i32
    return %c0_i32, %c0_i32_0 : i32, i32
  }
  func.func @transform_3(%arg0: i32) -> (i32, i32) {
    %c0_i32 = arith.constant 0 : i32
    %c0_i32_0 = arith.constant 0 : i32
    %c0_i32_1 = arith.constant 0 : i32
    return %c0_i32, %c0_i32_0 : i32, i32
  }
  func.func @transform_4(%arg0: i32) -> (i32, i32) {
    %c0_i32 = arith.constant 0 : i32
    %c0_i32_0 = arith.constant 0 : i32
    %c0_i32_1 = arith.constant 0 : i32
    return %c0_i32, %c0_i32_0 : i32, i32
  }
  func.func @transform_5(%arg0: i32) -> (i32, i32) {
    %c0_i32 = arith.constant 0 : i32
    %c0_i32_0 = arith.constant 0 : i32
    %c0_i32_1 = arith.constant 0 : i32
    return %c0_i32, %c0_i32_0 : i32, i32
  }
  func.func @transform_6(%arg0: i32) -> (i32, i32) {
    %c0_i32 = arith.constant 0 : i32
    %c0_i32_0 = arith.constant 0 : i32
    %c0_i32_1 = arith.constant 0 : i32
    return %c0_i32, %c0_i32_0 : i32, i32
  }
  func.func @transform_7(%arg0: i32) -> (i32, i32) {
    %c0_i32 = arith.constant 0 : i32
    %c0_i32_0 = arith.constant 0 : i32
    return %arg0, %c0_i32 : i32, i32
  }
}

</mosaic_0001>

<llo_original>
// kernel: tpu_custom_call.1
$region0: #{tpu_custom_call.1}
  #allocation0 [shape = 'u32[]', space=smem, size = 0x4, offset = 0x4, fixed_abs, tag = 'smem constant byte address 0x4 - core index']
  #allocation1 [shape = 'u32[72,128]{1,0:T(1,128)}', space=vmem, size = 0x9000, scoped, tag = 'internal scratch']
  %s0 = inlined_call_operand.hbm [shape: f32[8,8], index: 0, kind: input, shape index: {}]
  %s1 = inlined_call_operand.hbm [shape: bf16[8,64], index: 1, kind: input, shape index: {}]
  %s2 = inlined_call_operand.vmem [shape: f32[1,64], index: 2, kind: input, shape index: {}]
  %s3 = inlined_call_operand.hbm [shape: bf16[64,64], index: 3, kind: input, shape index: {}]
  %s4 = inlined_call_operand.vmem [shape: f32[1,64], index: 4, kind: input, shape index: {}]
  %s5 = inlined_call_operand.hbm [shape: bf16[64,128], index: 5, kind: input, shape index: {}]
  %s6 = inlined_call_operand.vmem [shape: f32[1,128], index: 6, kind: input, shape index: {}]
  %s7 = inlined_call_operand.hbm [shape: f32[8,128], index: 7, kind: output, shape index: {}]
  %s8 = sld [smem:[#allocation0]]
  $region54: #{tpu_custom_call.1} parent=0
    _
  %s10 = ssub.s32 1, %s8
  %s11 = scalar_select 0, %s10, %s8
  $region1: #{tpu_custom_call.1} parent=0
    #allocation2 [shape = 'u8[4096]{0}', space=vmem, size = 0x1000, scoped, tag = 'input window, operand 0, single buffered']
    #allocation3 [shape = 's32[1]{0}', space=sflag, size = 0x4, scoped, tag = 'scoped memory for tpu_custom_call.1']
    #allocation4 [shape = 's32[1]{0}', space=sflag, size = 0x4, scoped, tag = 'scoped memory for tpu_custom_call.1']
    #allocation5 [shape = 'u8[2048]{0}', space=vmem, size = 0x800, scoped, tag = 'input window, operand 1, single buffered']
    #allocation6 [shape = 's32[1]{0}', space=sflag, size = 0x4, scoped, tag = 'scoped memory for tpu_custom_call.1']
    #allocation7 [shape = 'u8[16384]{0}', space=vmem, size = 0x4000, scoped, tag = 'input window, operand 3, single buffered']
    #allocation8 [shape = 'u8[16384]{0}', space=vmem, size = 0x4000, scoped, tag = 'input window, operand 5, single buffered']
    #allocation9 [shape = 's32[1]{0}', space=sflag, size = 0x4, scoped, tag = 'scoped memory for tpu_custom_call.1']
    #allocation10 [shape = 'u8[4096]{0}', space=vmem, size = 0x1000, scoped, tag = 'output window, operand 0, single buffered']
    %12 = vsyncpa [#allocation3], 0
    %13 = vsyncpa [#allocation6], 0
    %14 = vsyncpa [#allocation9], 0
    %15 = vsyncpa [#allocation4], 0
    // Predicated region
    $region2: #{tpu_custom_call.1} parent=1 // pred_check
      _
    $region3: #{tpu_custom_call.1} parent=1 // pred_check_branch
      %17 = sbr.rel (0) target = $region5
    $region4: #{tpu_custom_call.1} parent=1 // pred_region
      %19 = vsyncadd [#allocation3], 0
      %s21 = sshll.u32 %s0, 4
      %s22 = int_to_ptr.hbm [resolvable:$true] %s21
      %s23 = sshll.u32 [#allocation2], 4
      %s24 = int_to_ptr.vmem [resolvable:$true] %s23
      %26 = dma.hbm_to_vmem [thread:$0]  %s22, 128, %s24, [#allocation3]
    $region5: #{tpu_custom_call.1} parent=1 // pred_fallthru
      _
    // Predicated region
    $region6: #{tpu_custom_call.1} parent=1 // pred_check
      _
    $region7: #{tpu_custom_call.1} parent=1 // pred_check_branch
      %28 = sbr.rel (0) target = $region9
    $region8: #{tpu_custom_call.1} parent=1 // pred_region
      %30 = vsyncadd [#allocation6], 0
      %s32 = sshll.u32 %s1, 4
      %s33 = int_to_ptr.hbm [resolvable:$true] %s32
      %s34 = sshll.u32 [#allocation5], 4
      %s35 = int_to_ptr.vmem [resolvable:$true] %s34
      %37 = dma.hbm_to_vmem [thread:$0]  %s33, 64, %s35, [#allocation6]
    $region9: #{tpu_custom_call.1} parent=1 // pred_fallthru
      _
    // Predicated region
    $region10: #{tpu_custom_call.1} parent=1 // pred_check
      _
    $region11: #{tpu_custom_call.1} parent=1 // pred_check_branch
      %39 = sbr.rel (0) target = $region13
    $region12: #{tpu_custom_call.1} parent=1 // pred_region
      _
    $region13: #{tpu_custom_call.1} parent=1 // pred_fallthru
      _
    // Predicated region
    $region14: #{tpu_custom_call.1} parent=1 // pred_check
      _
    $region15: #{tpu_custom_call.1} parent=1 // pred_check_branch
      %41 = sbr.rel (0) target = $region17
    $region16: #{tpu_custom_call.1} parent=1 // pred_region
      %43 = vsyncadd [#allocation6], 0
      %s44 = sshll.u32 %s3, 4
      %s45 = int_to_ptr.hbm [resolvable:$true] %s44
      %s46 = sshll.u32 [#allocation7], 4
      %s47 = int_to_ptr.vmem [resolvable:$true] %s46
      %52 = dma.hbm_to_vmem [thread:$0]  %s45, 512, %s47, [#allocation6], 64, 64, 4
    $region17: #{tpu_custom_call.1} parent=1 // pred_fallthru
      _
    // Predicated region
    $region18: #{tpu_custom_call.1} parent=1 // pred_check
      _
    $region19: #{tpu_custom_call.1} parent=1 // pred_check_branch
      %54 = sbr.rel (0) target = $region21
    $region20: #{tpu_custom_call.1} parent=1 // pred_region
      _
    $region21: #{tpu_custom_call.1} parent=1 // pred_fallthru
      _
    // Predicated region
    $region22: #{tpu_custom_call.1} parent=1 // pred_check
      _
    $region23: #{tpu_custom_call.1} parent=1 // pred_check_branch
      %56 = sbr.rel (0) target = $region25
    $region24: #{tpu_custom_call.1} parent=1 // pred_region
      %58 = vsyncadd [#allocation9], 0
      %s59 = sshll.u32 %s5, 4
      %s60 = int_to_ptr.hbm [resolvable:$true] %s59
      %s61 = sshll.u32 [#allocation8], 4
      %s62 = int_to_ptr.vmem [resolvable:$true] %s61
      %67 = dma.hbm_to_vmem [thread:$0]  %s60, 512, %s62, [#allocation9], 64, 64, 4
    $region25: #{tpu_custom_call.1} parent=1 // pred_fallthru
      _
    // Predicated region
    $region26: #{tpu_custom_call.1} parent=1 // pred_check
      _
    $region27: #{tpu_custom_call.1} parent=1 // pred_check_branch
      %69 = sbr.rel (0) target = $region29
    $region28: #{tpu_custom_call.1} parent=1 // pred_region
      _
    $region29: #{tpu_custom_call.1} parent=1 // pred_fallthru
      _
    // Predicated region
    $region30: #{tpu_custom_call.1} parent=1 // pred_check
      _
    $region31: #{tpu_custom_call.1} parent=1 // pred_check_branch
      %71 = sbr.rel (0) target = $region33
    $region32: #{tpu_custom_call.1} parent=1 // pred_region
      %73 = dma.done [#allocation3], 128
    $region33: #{tpu_custom_call.1} parent=1 // pred_fallthru
      _
    // Predicated region
    $region34: #{tpu_custom_call.1} parent=1 // pred_check
      _
    $region35: #{tpu_custom_call.1} parent=1 // pred_check_branch
      %75 = sbr.rel (0) target = $region37
    $region36: #{tpu_custom_call.1} parent=1 // pred_region
      %77 = dma.done [#allocation6], 64
    $region37: #{tpu_custom_call.1} parent=1 // pred_fallthru
      _
    // Predicated region
    $region38: #{tpu_custom_call.1} parent=1 // pred_check
      _
    $region39: #{tpu_custom_call.1} parent=1 // pred_check_branch
      %79 = sbr.rel (0) target = $region41
    $region40: #{tpu_custom_call.1} parent=1 // pred_region
      %81 = dma.done [#allocation6], 512
    $region41: #{tpu_custom_call.1} parent=1 // pred_fallthru
      _
    // Predicated region
    $region42: #{tpu_custom_call.1} parent=1 // pred_check
      _
    $region43: #{tpu_custom_call.1} parent=1 // pred_check_branch
      %83 = sbr.rel (0) target = $region45
    $region44: #{tpu_custom_call.1} parent=1 // pred_region
      %85 = dma.done [#allocation9], 512
    $region45: #{tpu_custom_call.1} parent=1 // pred_fallthru
      _
    %v87 = vld [vmem:[#allocation2] sm:$0xff]
    %v88 = vpack.c.bf16 %v87, %v87
    %v89 = vld [vmem:[#allocation5] sm:$0xf]
    %v90 = vld [vmem:[%s2] sm:$0x1]
    %v92 = vperm.slane %v90, 0
    %vm94 = vcmask 64512
    %v96 = vsel %vm94, %v88, 0
    %vm98 = vcmask 1043456
    %v100 = vsel %vm98, %v89, 0
    %102 = vmatpush.bf16.msra.mxu0 0
    %103 = vmatpush.bf16.msra.mxu0 0
    %104 = vmatpush.bf16.msra.mxu0 0
    %105 = vmatpush.bf16.msra.mxu0 0
    %106 = vmatpush.bf16.msra.mxu0 0
    %107 = vmatpush.bf16.msra.mxu0 0
    %108 = vmatpush.bf16.msra.mxu0 0
    %109 = vmatpush.bf16.msra.mxu0 %v100
    %110 = vmatmul.bf16.gmra.mxu0 %v96
    %v111 = vpop.f32.mrf.mxu0
    %v112 = vadd.f32 %v92, %v111
    %v113 = vpop.f32.mrf.mxu0
    %114 = vdwg.mxu0
    %v115 = vmax.f32 %v112, 0.0
    %v116 = vpack.c.bf16 %v115, %v115
    %v117 = vld [vmem:[#allocation7] sm:$0xf]
    %v118 = vld [vmem:[#allocation7 + $0x4] sm:$0xf]
    %v119 = vld [vmem:[#allocation7 + $0x8] sm:$0xf]
    %v120 = vld [vmem:[#allocation7 + $0xc] sm:$0xf]
    %v121 = vld [vmem:[#allocation7 + $0x10] sm:$0xf]
    %v122 = vld [vmem:[#allocation7 + $0x14] sm:$0xf]
    %v123 = vld [vmem:[#allocation7 + $0x18] sm:$0xf]
    %v124 = vld [vmem:[#allocation7 + $0x1c] sm:$0xf]
    %v125 = vld [vmem:[%s4] sm:$0x1]
    %v127 = vperm.slane %v125, 0
    %v137 = vunpack.c.l.b16 %v117
    %v138 = vunpack.c.l.b16 %v118
    %v139 = vunpack.c.l.b16 %v119
    %v140 = vunpack.c.l.b16 %v120
    %v141 = vunpack.c.l.b16 %v121
    %v142 = vunpack.c.l.b16 %v122
    %v143 = vunpack.c.l.b16 %v123
    %v144 = vunpack.c.l.b16 %v124
    %v145 = vpack.c.b16 %v138, %v137
    %v146 = vpack.c.b16 %v140, %v139
    %v147 = vpack.c.b16 %v142, %v141
    %v148 = vpack.c.b16 %v144, %v143
    %vm153 = vcmask 523264
    %v155 = vsel %vm153, %v116, 0
    %157 = vmatpush.bf16.msra.mxu0 0
    %158 = vmatpush.bf16.msra.mxu0 0
    %159 = vmatpush.bf16.msra.mxu0 0
    %160 = vmatpush.bf16.msra.mxu0 0
    %161 = vmatpush.bf16.msra.mxu0 %v148
    %162 = vmatpush.bf16.msra.mxu0 %v147
    %163 = vmatpush.bf16.msra.mxu0 %v146
    %164 = vmatpush.bf16.msra.mxu0 %v145
    %165 = vmatmul.bf16.gmra.mxu0 %v155
    %v166 = vpop.f32.mrf.mxu0
    %v167 = vadd.f32 %v127, %v166
    %v168 = vpop.f32.mrf.mxu0
    %169 = vdwg.mxu0
    %v170 = vmax.f32 %v167, 0.0
    %v171 = vpack.c.bf16 %v170, %v170
    %v172 = vld [vmem:[#allocation8] sm:$0xf]
    %v173 = vld [vmem:[#allocation8 + $0x4] sm:$0xf]
    %v174 = vld [vmem:[#allocation8 + $0x8] sm:$0xf]
    %v175 = vld [vmem:[#allocation8 + $0xc] sm:$0xf]
    %v176 = vld [vmem:[#allocation8 + $0x10] sm:$0xf]
    %v177 = vld [vmem:[#allocation8 + $0x14] sm:$0xf]
    %v178 = vld [vmem:[#allocation8 + $0x18] sm:$0xf]
    %v179 = vld [vmem:[#allocation8 + $0x1c] sm:$0xf]
    %v180 = vld [vmem:[%s6] sm:$0x1]
    %v182 = vperm.slane %v180, 0
    %v192 = vunpack.c.l.b16 %v172
    %v193 = vunpack.c.l.b16 %v173
    %v194 = vunpack.c.l.b16 %v174
    %v195 = vunpack.c.l.b16 %v175
    %v196 = vunpack.c.l.b16 %v176
    %v197 = vunpack.c.l.b16 %v177
    %v198 = vunpack.c.l.b16 %v178
    %v199 = vunpack.c.l.b16 %v179
    %v200 = vpack.c.b16 %v193, %v192
    %v201 = vpack.c.b16 %v195, %v194
    %v202 = vpack.c.b16 %v197, %v196
    %v203 = vpack.c.b16 %v199, %v198
    %v209 = vsel %vm153, %v171, 0
    %211 = vmatpush.bf16.msra.mxu0 0
    %212 = vmatpush.bf16.msra.mxu0 0
    %213 = vmatpush.bf16.msra.mxu0 0
    %214 = vmatpush.bf16.msra.mxu0 0
    %215 = vmatpush.bf16.msra.mxu0 %v203
    %216 = vmatpush.bf16.msra.mxu0 %v202
    %217 = vmatpush.bf16.msra.mxu0 %v201
    %218 = vmatpush.bf16.msra.mxu0 %v200
    %219 = vmatmul.bf16.gmra.mxu0 %v209
    %v220 = vpop.f32.mrf.mxu0
    %v221 = vadd.f32 %v182, %v220
    %v222 = vpop.f32.mrf.mxu0
    %223 = vdwg.mxu0
    %224 = vst [vmem:[#allocation10] sm:$0xff] %v221
    // Predicated region
    $region46: #{tpu_custom_call.1} parent=1 // pred_check
      _
    $region47: #{tpu_custom_call.1} parent=1 // pred_check_branch
      %226 = sbr.rel (0) target = $region49
    $region48: #{tpu_custom_call.1} parent=1 // pred_region
      %228 = vsyncadd [#allocation4], 0
      %s230 = sshll.u32 [#allocation10], 4
      %s231 = int_to_ptr.vmem [resolvable:$true] %s230
      %s232 = sshll.u32 %s7, 4
      %s233 = int_to_ptr.hbm [resolvable:$true] %s232
      %235 = dma.vmem_to_hbm [thread:$0]  %s231, 128, %s233, [#allocation4]
    $region49: #{tpu_custom_call.1} parent=1 // pred_fallthru
      _
    // Predicated region
    $region50: #{tpu_custom_call.1} parent=1 // pred_check
      _
    $region51: #{tpu_custom_call.1} parent=1 // pred_check_branch
      %237 = sbr.rel (0) target = $region53
    $region52: #{tpu_custom_call.1} parent=1 // pred_region
      %239 = dma.done [#allocation4], 128
    $region53: #{tpu_custom_call.1} parent=1 // pred_fallthru
      _
    %240 = vsyncpa [#allocation3], 1
    %241 = vsyncpa [#allocation6], 1
    %242 = vsyncpa [#allocation9], 1
    %243 = vsyncpa [#allocation4], 1

</llo_original>
